<compile_context>
chip_gen: v6e
topology: v6e:2x2x1
jax: 0.10.0
libtpu: 0.0.40
codegen_flags: <defaults>
</compile_context>

<pallas_src>
import functools

import jax
import jax.numpy as jnp
from jax import lax
from jax.experimental import pallas as pl
from jax.experimental.pallas import tpu as pltpu

D_MODEL = 32
MAX_LEN = 512
LN_EPS = 1e-12
LANES = 128
TILE_ROWS = 1024  # packed rows per grid step: 1024*128*4B = 512 KiB per buffer


def pos_enc_kernel(x_ref, pos_ref, gamma_ref, beta_ref, o_ref, *, d, pack):
    # x_ref / pos_ref / o_ref : [TR, 128]  (pack logical rows of d features per row)
    # gamma_ref / beta_ref    : [1, 128]   (gamma/beta tiled `pack` times along lanes)
    x = x_ref[...].astype(jnp.float32)
    pos = pos_ref[...].astype(jnp.float32)
    emb = x + pos  # token-type row already folded into pos in the wrapper

    # Lane-group masks for the segmented LayerNorm (each 32-lane group is one
    # logical row).  Computed once, reused for mean and variance.
    lane = lax.broadcasted_iota(jnp.int32, (1, LANES), 1)
    masks = [
        ((lane >= g * d) & (lane < (g + 1) * d)).astype(jnp.float32)  # [1, 128]
        for g in range(pack)
    ]
    inv_d = jnp.float32(1.0 / d)

    # Segmented mean (biased, like torch.nn.LayerNorm), broadcast back per group.
    mean = jnp.zeros_like(emb)
    for m_g in masks:
        s_g = jnp.sum(emb * m_g, axis=-1, keepdims=True)  # [TR, 1]
        mean = mean + (s_g * inv_d) * m_g
    centered = emb - mean

    # Segmented biased variance of the centered values (two-pass, exact f32).
    sq = centered * centered
    var = jnp.zeros_like(emb)
    for m_g in masks:
        s_g = jnp.sum(sq * m_g, axis=-1, keepdims=True)
        var = var + (s_g * inv_d) * m_g

    normed = centered * lax.rsqrt(var + LN_EPS)
    out = normed * gamma_ref[...].astype(jnp.float32) + beta_ref[...].astype(jnp.float32)

    # TODO(synk): dropout(p=0.1) omitted (eval-mode identity); training parity
    # would add an in-kernel mask via pltpu.prng_seed + pltpu.prng_random_bits.
    o_ref[...] = out.astype(o_ref.dtype)


def positional_encodings(x, token_type, params, *, tile_rows=TILE_ROWS):
    """x: [S, B, D] float32. token_type: 'sound' or 'text' (static Python str)."""
    S, B, D = x.shape
    assert S <= MAX_LEN, "Input shape is longer than the maximum allowed (512)"
    assert LANES % D == 0, "d_model must divide 128 for the lane-dense packing"
    pack = LANES // D

    if token_type == "sound":
        tok_row = params["token_type_embeddings"][1]
    elif token_type == "text":
        tok_row = params["token_type_embeddings"][0]
    else:
        raise Exception("Invalid Token Type")

    # Fold token-type embedding into the position table (one fewer kernel input).
    pos_tok = params["position_embeddings"][:S] + tok_row[None, :]  # [S, D]

    # Flatten [S, B, D] -> [N, D]; pre-broadcast pos over batch.
    N = S * B
    x_flat = x.reshape(N, D)
    pos_flat = jnp.broadcast_to(pos_tok[:, None, :], (S, B, D)).reshape(N, D)

    # Pack `pack` logical rows per 128-lane row -> lane-dense [R, 128] view.
    R = pl.cdiv(N, pack)
    tr = R if R <= tile_rows else tile_rows
    R_pad = pl.cdiv(R, tr) * tr
    N_pad = R_pad * pack
    if N_pad != N:
        padn = N_pad - N
        x_flat = jnp.pad(x_flat, ((0, padn), (0, 0)))
        pos_flat = jnp.pad(pos_flat, ((0, padn), (0, 0)))
    x2 = x_flat.reshape(R_pad, LANES)
    pos2 = pos_flat.reshape(R_pad, LANES)

    gamma = jnp.tile(params["ln_gamma"], pack).reshape(1, LANES)
    beta = jnp.tile(params["ln_beta"], pack).reshape(1, LANES)

    kernel = functools.partial(pos_enc_kernel, d=D, pack=pack)
    grid = (R_pad // tr,)
    out2 = pl.pallas_call(
        kernel,
        out_shape=jax.ShapeDtypeStruct((R_pad, LANES), x.dtype),
        grid_spec=pltpu.PrefetchScalarGridSpec(
            num_scalar_prefetch=0,
            grid=grid,
            in_specs=[
                pl.BlockSpec((tr, LANES), lambda i: (i, 0)),   # x (packed)
                pl.BlockSpec((tr, LANES), lambda i: (i, 0)),   # pos+tok (packed)
                pl.BlockSpec((1, LANES), lambda i: (0, 0)),    # gamma (tiled x pack)
                pl.BlockSpec((1, LANES), lambda i: (0, 0)),    # beta  (tiled x pack)
            ],
            out_specs=pl.BlockSpec((tr, LANES), lambda i: (i, 0)),
        ),
        compiler_params=pltpu.CompilerParams(
            dimension_semantics=("parallel",)),
    )(x2, pos2, gamma, beta)

    return out2.reshape(N_pad, D)[:N].reshape(S, B, D)


def init_params(key, d_model=D_MODEL, max_len=MAX_LEN):
    k1, k2 = jax.random.split(key)
    return {
        # nn.Embedding default init: N(0, 1)
        "position_embeddings": jax.random.normal(k1, (max_len, d_model), jnp.float32),
        "token_type_embeddings": jax.random.normal(k2, (2, d_model), jnp.float32),
        # nn.LayerNorm default init: weight=1, bias=0
        "ln_gamma": jnp.ones((d_model,), jnp.float32),
        "ln_beta": jnp.zeros((d_model,), jnp.float32),
    }


if __name__ == "__main__":
    key = jax.random.PRNGKey(0)
    pkey, xkey = jax.random.split(key)
    params = init_params(pkey)

    S, B, D = 8, 2, D_MODEL
    x = jax.random.normal(xkey, (S, B, D), jnp.float32)

    out = positional_encodings(x, "sound", params)
    jax.block_until_ready(out)

    # Reference check in plain JAX (eval-mode semantics of the PyTorch module).
    pos = params["position_embeddings"][:S][:, None, :]
    tok = params["token_type_embeddings"][1][None, None, :]
    emb = x + pos + tok
    mean = jnp.mean(emb, axis=-1, keepdims=True)
    var = jnp.mean((emb - mean) ** 2, axis=-1, keepdims=True)
    ref = (emb - mean) / jnp.sqrt(var + LN_EPS) * params["ln_gamma"] + params["ln_beta"]
    assert out.shape == (S, B, D)
    assert jnp.allclose(out, ref, atol=1e-5, rtol=1e-5), "mismatch vs reference"

    print("KERNEL_OK")
</pallas_src>

<mosaic_0001>
module attributes {stable_mosaic.version = 11 : i64} {
  func.func @pos_enc_kernel(%arg0: i32, %arg1: memref<4x128xf32, #tpu.memory_space<vmem>>, %arg2: memref<4x128xf32, #tpu.memory_space<vmem>>, %arg3: memref<1x128xf32, #tpu.memory_space<vmem>>, %arg4: memref<1x128xf32, #tpu.memory_space<vmem>>, %arg5: memref<4x128xf32, #tpu.memory_space<vmem>>) attributes {dimension_semantics = [#tpu.dimension_semantics<parallel>], iteration_bounds = array<i64: 1>, scalar_prefetch = 0 : i64, scratch_operands = 0 : i64, tpu.core_type = #tpu.core_type<tc>, window_params = [{transform_indices = @transform_0, window_bounds = array<i64: 4, 128>}, {transform_indices = @transform_1, window_bounds = array<i64: 4, 128>}, {pipeline_mode = #tpu.pipeline_mode<synchronous>, transform_indices = @transform_2, window_bounds = array<i64: 1, 128>}, {pipeline_mode = #tpu.pipeline_mode<synchronous>, transform_indices = @transform_3, window_bounds = array<i64: 1, 128>}, {transform_indices = @transform_4, window_bounds = array<i64: 4, 128>}]} {
    %c0 = arith.constant 0 : index
    %c0_0 = arith.constant 0 : index
    %0 = vector.load %arg1[%c0, %c0_0] : memref<4x128xf32, #tpu.memory_space<vmem>>, vector<4x128xf32>
    %c0_1 = arith.constant 0 : index
    %c0_2 = arith.constant 0 : index
    %1 = vector.load %arg2[%c0_1, %c0_2] : memref<4x128xf32, #tpu.memory_space<vmem>>, vector<4x128xf32>
    %2 = arith.addf %0, %1 : vector<4x128xf32>
    %3 = tpu.iota {dimensions = array<i32: 1>} : vector<1x128xi32>
    %c0_i32 = arith.constant 0 : i32
    %4 = vector.broadcast %c0_i32 : i32 to vector<1x128xi32>
    %5 = arith.cmpi sge, %3, %4 : vector<1x128xi32>
    %c32_i32 = arith.constant 32 : i32
    %6 = vector.broadcast %c32_i32 : i32 to vector<1x128xi32>
    %7 = arith.cmpi slt, %3, %6 : vector<1x128xi32>
    %8 = arith.andi %5, %7 : vector<1x128xi1>
    %9 = arith.extui %8 : vector<1x128xi1> to vector<1x128xi32>
    %10 = arith.sitofp %9 : vector<1x128xi32> to vector<1x128xf32>
    %c32_i32_3 = arith.constant 32 : i32
    %11 = vector.broadcast %c32_i32_3 : i32 to vector<1x128xi32>
    %12 = arith.cmpi sge, %3, %11 : vector<1x128xi32>
    %c64_i32 = arith.constant 64 : i32
    %13 = vector.broadcast %c64_i32 : i32 to vector<1x128xi32>
    %14 = arith.cmpi slt, %3, %13 : vector<1x128xi32>
    %15 = arith.andi %12, %14 : vector<1x128xi1>
    %16 = arith.extui %15 : vector<1x128xi1> to vector<1x128xi32>
    %17 = arith.sitofp %16 : vector<1x128xi32> to vector<1x128xf32>
    %c64_i32_4 = arith.constant 64 : i32
    %18 = vector.broadcast %c64_i32_4 : i32 to vector<1x128xi32>
    %19 = arith.cmpi sge, %3, %18 : vector<1x128xi32>
    %c96_i32 = arith.constant 96 : i32
    %20 = vector.broadcast %c96_i32 : i32 to vector<1x128xi32>
    %21 = arith.cmpi slt, %3, %20 : vector<1x128xi32>
    %22 = arith.andi %19, %21 : vector<1x128xi1>
    %23 = arith.extui %22 : vector<1x128xi1> to vector<1x128xi32>
    %24 = arith.sitofp %23 : vector<1x128xi32> to vector<1x128xf32>
    %c96_i32_5 = arith.constant 96 : i32
    %25 = vector.broadcast %c96_i32_5 : i32 to vector<1x128xi32>
    %26 = arith.cmpi sge, %3, %25 : vector<1x128xi32>
    %c128_i32 = arith.constant 128 : i32
    %27 = vector.broadcast %c128_i32 : i32 to vector<1x128xi32>
    %28 = arith.cmpi slt, %3, %27 : vector<1x128xi32>
    %29 = arith.andi %26, %28 : vector<1x128xi1>
    %30 = arith.extui %29 : vector<1x128xi1> to vector<1x128xi32>
    %31 = arith.sitofp %30 : vector<1x128xi32> to vector<1x128xf32>
    %cst = arith.constant 0.000000e+00 : f32
    %32 = vector.broadcast %cst : f32 to vector<4x128xf32>
    %33 = vector.broadcast %10 : vector<1x128xf32> to vector<4x128xf32>
    %34 = arith.mulf %2, %33 : vector<4x128xf32>
    %cst_6 = arith.constant dense<0.000000e+00> : vector<4xf32>
    %35 = vector.multi_reduction <add>, %34, %cst_6 [1] : vector<4x128xf32> to vector<4xf32>
    %36 = vector.shape_cast %35 : vector<4xf32> to vector<4x1xf32>
    %cst_7 = arith.constant 3.125000e-02 : f32
    %37 = vector.broadcast %cst_7 : f32 to vector<4x1xf32>
    %38 = arith.mulf %36, %37 : vector<4x1xf32>
    %39 = vector.broadcast %38 : vector<4x1xf32> to vector<4x128xf32>
    %40 = vector.broadcast %10 : vector<1x128xf32> to vector<4x128xf32>
    %41 = arith.mulf %39, %40 : vector<4x128xf32>
    %42 = arith.addf %32, %41 : vector<4x128xf32>
    %43 = vector.broadcast %17 : vector<1x128xf32> to vector<4x128xf32>
    %44 = arith.mulf %2, %43 : vector<4x128xf32>
    %cst_8 = arith.constant dense<0.000000e+00> : vector<4xf32>
    %45 = vector.multi_reduction <add>, %44, %cst_8 [1] : vector<4x128xf32> to vector<4xf32>
    %46 = vector.shape_cast %45 : vector<4xf32> to vector<4x1xf32>
    %cst_9 = arith.constant 3.125000e-02 : f32
    %47 = vector.broadcast %cst_9 : f32 to vector<4x1xf32>
    %48 = arith.mulf %46, %47 : vector<4x1xf32>
    %49 = vector.broadcast %48 : vector<4x1xf32> to vector<4x128xf32>
    %50 = vector.broadcast %17 : vector<1x128xf32> to vector<4x128xf32>
    %51 = arith.mulf %49, %50 : vector<4x128xf32>
    %52 = arith.addf %42, %51 : vector<4x128xf32>
    %53 = vector.broadcast %24 : vector<1x128xf32> to vector<4x128xf32>
    %54 = arith.mulf %2, %53 : vector<4x128xf32>
    %cst_10 = arith.constant dense<0.000000e+00> : vector<4xf32>
    %55 = vector.multi_reduction <add>, %54, %cst_10 [1] : vector<4x128xf32> to vector<4xf32>
    %56 = vector.shape_cast %55 : vector<4xf32> to vector<4x1xf32>
    %cst_11 = arith.constant 3.125000e-02 : f32
    %57 = vector.broadcast %cst_11 : f32 to vector<4x1xf32>
    %58 = arith.mulf %56, %57 : vector<4x1xf32>
    %59 = vector.broadcast %58 : vector<4x1xf32> to vector<4x128xf32>
    %60 = vector.broadcast %24 : vector<1x128xf32> to vector<4x128xf32>
    %61 = arith.mulf %59, %60 : vector<4x128xf32>
    %62 = arith.addf %52, %61 : vector<4x128xf32>
    %63 = vector.broadcast %31 : vector<1x128xf32> to vector<4x128xf32>
    %64 = arith.mulf %2, %63 : vector<4x128xf32>
    %cst_12 = arith.constant dense<0.000000e+00> : vector<4xf32>
    %65 = vector.multi_reduction <add>, %64, %cst_12 [1] : vector<4x128xf32> to vector<4xf32>
    %66 = vector.shape_cast %65 : vector<4xf32> to vector<4x1xf32>
    %cst_13 = arith.constant 3.125000e-02 : f32
    %67 = vector.broadcast %cst_13 : f32 to vector<4x1xf32>
    %68 = arith.mulf %66, %67 : vector<4x1xf32>
    %69 = vector.broadcast %68 : vector<4x1xf32> to vector<4x128xf32>
    %70 = vector.broadcast %31 : vector<1x128xf32> to vector<4x128xf32>
    %71 = arith.mulf %69, %70 : vector<4x128xf32>
    %72 = arith.addf %62, %71 : vector<4x128xf32>
    %73 = arith.subf %2, %72 : vector<4x128xf32>
    %74 = arith.mulf %73, %73 : vector<4x128xf32>
    %cst_14 = arith.constant 0.000000e+00 : f32
    %75 = vector.broadcast %cst_14 : f32 to vector<4x128xf32>
    %76 = vector.broadcast %10 : vector<1x128xf32> to vector<4x128xf32>
    %77 = arith.mulf %74, %76 : vector<4x128xf32>
    %cst_15 = arith.constant dense<0.000000e+00> : vector<4xf32>
    %78 = vector.multi_reduction <add>, %77, %cst_15 [1] : vector<4x128xf32> to vector<4xf32>
    %79 = vector.shape_cast %78 : vector<4xf32> to vector<4x1xf32>
    %cst_16 = arith.constant 3.125000e-02 : f32
    %80 = vector.broadcast %cst_16 : f32 to vector<4x1xf32>
    %81 = arith.mulf %79, %80 : vector<4x1xf32>
    %82 = vector.broadcast %81 : vector<4x1xf32> to vector<4x128xf32>
    %83 = vector.broadcast %10 : vector<1x128xf32> to vector<4x128xf32>
    %84 = arith.mulf %82, %83 : vector<4x128xf32>
    %85 = arith.addf %75, %84 : vector<4x128xf32>
    %86 = vector.broadcast %17 : vector<1x128xf32> to vector<4x128xf32>
    %87 = arith.mulf %74, %86 : vector<4x128xf32>
    %cst_17 = arith.constant dense<0.000000e+00> : vector<4xf32>
    %88 = vector.multi_reduction <add>, %87, %cst_17 [1] : vector<4x128xf32> to vector<4xf32>
    %89 = vector.shape_cast %88 : vector<4xf32> to vector<4x1xf32>
    %cst_18 = arith.constant 3.125000e-02 : f32
    %90 = vector.broadcast %cst_18 : f32 to vector<4x1xf32>
    %91 = arith.mulf %89, %90 : vector<4x1xf32>
    %92 = vector.broadcast %91 : vector<4x1xf32> to vector<4x128xf32>
    %93 = vector.broadcast %17 : vector<1x128xf32> to vector<4x128xf32>
    %94 = arith.mulf %92, %93 : vector<4x128xf32>
    %95 = arith.addf %85, %94 : vector<4x128xf32>
    %96 = vector.broadcast %24 : vector<1x128xf32> to vector<4x128xf32>
    %97 = arith.mulf %74, %96 : vector<4x128xf32>
    %cst_19 = arith.constant dense<0.000000e+00> : vector<4xf32>
    %98 = vector.multi_reduction <add>, %97, %cst_19 [1] : vector<4x128xf32> to vector<4xf32>
    %99 = vector.shape_cast %98 : vector<4xf32> to vector<4x1xf32>
    %cst_20 = arith.constant 3.125000e-02 : f32
    %100 = vector.broadcast %cst_20 : f32 to vector<4x1xf32>
    %101 = arith.mulf %99, %100 : vector<4x1xf32>
    %102 = vector.broadcast %101 : vector<4x1xf32> to vector<4x128xf32>
    %103 = vector.broadcast %24 : vector<1x128xf32> to vector<4x128xf32>
    %104 = arith.mulf %102, %103 : vector<4x128xf32>
    %105 = arith.addf %95, %104 : vector<4x128xf32>
    %106 = vector.broadcast %31 : vector<1x128xf32> to vector<4x128xf32>
    %107 = arith.mulf %74, %106 : vector<4x128xf32>
    %cst_21 = arith.constant dense<0.000000e+00> : vector<4xf32>
    %108 = vector.multi_reduction <add>, %107, %cst_21 [1] : vector<4x128xf32> to vector<4xf32>
    %109 = vector.shape_cast %108 : vector<4xf32> to vector<4x1xf32>
    %cst_22 = arith.constant 3.125000e-02 : f32
    %110 = vector.broadcast %cst_22 : f32 to vector<4x1xf32>
    %111 = arith.mulf %109, %110 : vector<4x1xf32>
    %112 = vector.broadcast %111 : vector<4x1xf32> to vector<4x128xf32>
    %113 = vector.broadcast %31 : vector<1x128xf32> to vector<4x128xf32>
    %114 = arith.mulf %112, %113 : vector<4x128xf32>
    %115 = arith.addf %105, %114 : vector<4x128xf32>
    %cst_23 = arith.constant 9.99999996E-13 : f32
    %116 = vector.broadcast %cst_23 : f32 to vector<4x128xf32>
    %117 = arith.addf %115, %116 : vector<4x128xf32>
    %118 = math.rsqrt %117 : vector<4x128xf32>
    %119 = arith.mulf %73, %118 : vector<4x128xf32>
    %c0_24 = arith.constant 0 : index
    %c0_25 = arith.constant 0 : index
    %120 = vector.load %arg3[%c0_24, %c0_25] : memref<1x128xf32, #tpu.memory_space<vmem>>, vector<1x128xf32>
    %121 = vector.broadcast %120 : vector<1x128xf32> to vector<4x128xf32>
    %122 = arith.mulf %119, %121 : vector<4x128xf32>
    %c0_26 = arith.constant 0 : index
    %c0_27 = arith.constant 0 : index
    %123 = vector.load %arg4[%c0_26, %c0_27] : memref<1x128xf32, #tpu.memory_space<vmem>>, vector<1x128xf32>
    %124 = vector.broadcast %123 : vector<1x128xf32> to vector<4x128xf32>
    %125 = arith.addf %122, %124 : vector<4x128xf32>
    %c0_28 = arith.constant 0 : index
    %c0_29 = arith.constant 0 : index
    %126 = vector.load %arg5[%c0_28, %c0_29] : memref<4x128xf32, #tpu.memory_space<vmem>>, vector<4x128xf32>
    tpu.vector_store %arg5[%c0_28, %c0_29], %125 {strides = array<i32>} : memref<4x128xf32, #tpu.memory_space<vmem>>, vector<4x128xf32>,
    return
  }
  func.func @transform_0(%arg0: i32) -> (i32, i32) {
    %c0_i32 = arith.constant 0 : i32
    %c0_i32_0 = arith.constant 0 : i32
    return %arg0, %c0_i32 : i32, i32
  }
  func.func @transform_1(%arg0: i32) -> (i32, i32) {
    %c0_i32 = arith.constant 0 : i32
    %c0_i32_0 = arith.constant 0 : i32
    return %arg0, %c0_i32 : i32, i32
  }
  func.func @transform_2(%arg0: i32) -> (i32, i32) {
    %c0_i32 = arith.constant 0 : i32
    %c0_i32_0 = arith.constant 0 : i32
    %c0_i32_1 = arith.constant 0 : i32
    return %c0_i32, %c0_i32_0 : i32, i32
  }
  func.func @transform_3(%arg0: i32) -> (i32, i32) {
    %c0_i32 = arith.constant 0 : i32
    %c0_i32_0 = arith.constant 0 : i32
    %c0_i32_1 = arith.constant 0 : i32
    return %c0_i32, %c0_i32_0 : i32, i32
  }
  func.func @transform_4(%arg0: i32) -> (i32, i32) {
    %c0_i32 = arith.constant 0 : i32
    %c0_i32_0 = arith.constant 0 : i32
    return %arg0, %c0_i32 : i32, i32
  }
}

</mosaic_0001>

<llo_original>
// kernel: tpu_custom_call.1
$region0: #{tpu_custom_call.1}
  #allocation0 [shape = 'u32[]', space=smem, size = 0x4, offset = 0x4, fixed_abs, tag = 'smem constant byte address 0x4 - core index']
  #allocation1 [shape = 'u32[144,128]{1,0:T(1,128)}', space=vmem, size = 0x12000, scoped, tag = 'internal scratch']
  %s0 = inlined_call_operand.hbm [shape: f32[4,128], index: 0, kind: input, shape index: {}]
  %s1 = inlined_call_operand.hbm [shape: f32[4,128], index: 1, kind: input, shape index: {}]
  %s2 = inlined_call_operand.vmem [shape: f32[1,128], index: 2, kind: input, shape index: {}]
  %s3 = inlined_call_operand.vmem [shape: f32[1,128], index: 3, kind: input, shape index: {}]
  %s4 = inlined_call_operand.hbm [shape: f32[4,128], index: 4, kind: output, shape index: {}]
  %s5 = sld [smem:[#allocation0]]
  $region34: #{tpu_custom_call.1} parent=0
    _
  %s7 = ssub.s32 1, %s5
  %s8 = scalar_select 0, %s7, %s5
  $region1: #{tpu_custom_call.1} parent=0
    #allocation2 [shape = 'u8[2048]{0}', space=vmem, size = 0x800, scoped, tag = 'input window, operand 0, single buffered']
    #allocation3 [shape = 's32[1]{0}', space=sflag, size = 0x4, scoped, tag = 'scoped memory for tpu_custom_call.1']
    #allocation4 [shape = 's32[1]{0}', space=sflag, size = 0x4, scoped, tag = 'scoped memory for tpu_custom_call.1']
    #allocation5 [shape = 'u8[2048]{0}', space=vmem, size = 0x800, scoped, tag = 'input window, operand 1, single buffered']
    #allocation6 [shape = 's32[1]{0}', space=sflag, size = 0x4, scoped, tag = 'scoped memory for tpu_custom_call.1']
    #allocation7 [shape = 'u8[2048]{0}', space=vmem, size = 0x800, scoped, tag = 'output window, operand 0, single buffered']
    %9 = vsyncpa [#allocation3], 0
    %10 = vsyncpa [#allocation6], 0
    %11 = vsyncpa [#allocation4], 0
    // Predicated region
    $region2: #{tpu_custom_call.1} parent=1 // pred_check
      _
    $region3: #{tpu_custom_call.1} parent=1 // pred_check_branch
      %13 = sbr.rel (0) target = $region5
    $region4: #{tpu_custom_call.1} parent=1 // pred_region
      %s15 = ssub.s32 64, 64
      %16 = vsyncadd [#allocation3], %s15
      %s18 = sshll.u32 [#allocation2], 4
      %s19 = int_to_ptr.vmem [resolvable:$true] %s18
      %21 = dma.hbm_to_vmem [thread:$0]  %s0, 64, %s19, [#allocation3]
    $region5: #{tpu_custom_call.1} parent=1 // pred_fallthru
      _
    // Predicated region
    $region6: #{tpu_custom_call.1} parent=1 // pred_check
      _
    $region7: #{tpu_custom_call.1} parent=1 // pred_check_branch
      %23 = sbr.rel (0) target = $region9
    $region8: #{tpu_custom_call.1} parent=1 // pred_region
      %s25 = ssub.s32 64, 64
      %26 = vsyncadd [#allocation6], %s25
      %s28 = sshll.u32 [#allocation5], 4
      %s29 = int_to_ptr.vmem [resolvable:$true] %s28
      %31 = dma.hbm_to_vmem [thread:$0]  %s1, 64, %s29, [#allocation6]
    $region9: #{tpu_custom_call.1} parent=1 // pred_fallthru
      _
    // Predicated region
    $region10: #{tpu_custom_call.1} parent=1 // pred_check
      _
    $region11: #{tpu_custom_call.1} parent=1 // pred_check_branch
      %33 = sbr.rel (0) target = $region13
    $region12: #{tpu_custom_call.1} parent=1 // pred_region
      _
    $region13: #{tpu_custom_call.1} parent=1 // pred_fallthru
      _
    // Predicated region
    $region14: #{tpu_custom_call.1} parent=1 // pred_check
      _
    $region15: #{tpu_custom_call.1} parent=1 // pred_check_branch
      %35 = sbr.rel (0) target = $region17
    $region16: #{tpu_custom_call.1} parent=1 // pred_region
      _
    $region17: #{tpu_custom_call.1} parent=1 // pred_fallthru
      _
    // Predicated region
    $region18: #{tpu_custom_call.1} parent=1 // pred_check
      _
    $region19: #{tpu_custom_call.1} parent=1 // pred_check_branch
      %37 = sbr.rel (0) target = $region21
    $region20: #{tpu_custom_call.1} parent=1 // pred_region
      %38 = dma.done [#allocation3], 64
    $region21: #{tpu_custom_call.1} parent=1 // pred_fallthru
      _
    // Predicated region
    $region22: #{tpu_custom_call.1} parent=1 // pred_check
      _
    $region23: #{tpu_custom_call.1} parent=1 // pred_check_branch
      %40 = sbr.rel (0) target = $region25
    $region24: #{tpu_custom_call.1} parent=1 // pred_region
      %41 = dma.done [#allocation6], 64
    $region25: #{tpu_custom_call.1} parent=1 // pred_fallthru
      _
    %v42 = vld [vmem:[#allocation2] sm:$0xf]
    %v43 = vld [vmem:[#allocation5] sm:$0xf]
    %v44 = vadd.f32 %v42, %v43
    %v45 = vlaneseq
    %v46 = vand.u32 %v45, 127
    %vm47 = vcmp.ge.s32.totalorder %v46, 0
    %vm48 = vcmp.lt.s32.totalorder %v46, 32
    %vm49 = vmand %vm47, %vm48
    %v50 = vsel %vm49, 1, 0
    %v51 = vcvt.s32.f32 %v50
    %vm52 = vcmp.ge.s32.totalorder %v46, 32
    %vm53 = vcmp.lt.s32.totalorder %v46, 64
    %vm54 = vmand %vm52, %vm53
    %v55 = vsel %vm54, 1, 0
    %v56 = vcvt.s32.f32 %v55
    %vm57 = vcmp.ge.s32.totalorder %v46, 64
    %vm58 = vcmp.lt.s32.totalorder %v46, 96
    %vm59 = vmand %vm57, %vm58
    %v60 = vsel %vm59, 1, 0
    %v61 = vcvt.s32.f32 %v60
    %vm62 = vcmp.ge.s32.totalorder %v46, 96
    %vm63 = vcmp.lt.s32.totalorder %v46, 128
    %vm64 = vmand %vm62, %vm63
    %v65 = vsel %vm64, 1, 0
    %v66 = vcvt.s32.f32 %v65
    %v67 = vmul.f32 %v44, %v51
    %vm68 = vcmask 1043456
    %v69 = vsel %vm68, %v67, 0.0
    %70 = vadd.xlane.f32.xlu0 %v69
    %v71 = vpop.xlane.xlu0 %70
    %v72 = vmul.f32 %v71, 0.03125
    %v73 = vmul.f32 %v72, %v51
    %v74 = vadd.f32 %v73, 0.0
    %v75 = vmul.f32 %v44, %v56
    %v76 = vsel %vm68, %v75, 0.0
    %77 = vadd.xlane.f32.xlu0 %v76
    %v78 = vpop.xlane.xlu0 %77
    %v79 = vmul.f32 %v78, 0.03125
    %v80 = vmul.f32 %v79, %v56
    %v81 = vadd.f32 %v74, %v80
    %v82 = vmul.f32 %v44, %v61
    %v83 = vsel %vm68, %v82, 0.0
    %84 = vadd.xlane.f32.xlu0 %v83
    %v85 = vpop.xlane.xlu0 %84
    %v86 = vmul.f32 %v85, 0.03125
    %v87 = vmul.f32 %v86, %v61
    %v88 = vadd.f32 %v81, %v87
    %v89 = vmul.f32 %v44, %v66
    %v90 = vsel %vm68, %v89, 0.0
    %91 = vadd.xlane.f32.xlu0 %v90
    %v92 = vpop.xlane.xlu0 %91
    %v93 = vmul.f32 %v92, 0.03125
    %v94 = vmul.f32 %v93, %v66
    %v95 = vadd.f32 %v88, %v94
    %v96 = vsub.f32 %v44, %v95
    %v97 = vmul.f32 %v96, %v96
    %v98 = vmul.f32 %v97, %v51
    %v99 = vsel %vm68, %v98, 0.0
    %100 = vadd.xlane.f32.xlu0 %v99
    %v101 = vpop.xlane.xlu0 %100
    %v102 = vmul.f32 %v101, 0.03125
    %v103 = vmul.f32 %v102, %v51
    %v104 = vadd.f32 %v103, 0.0
    %v105 = vmul.f32 %v97, %v56
    %v106 = vsel %vm68, %v105, 0.0
    %107 = vadd.xlane.f32.xlu0 %v106
    %v108 = vpop.xlane.xlu0 %107
    %v109 = vmul.f32 %v108, 0.03125
    %v110 = vmul.f32 %v109, %v56
    %v111 = vadd.f32 %v104, %v110
    %v112 = vmul.f32 %v97, %v61
    %v113 = vsel %vm68, %v112, 0.0
    %114 = vadd.xlane.f32.xlu0 %v113
    %v115 = vpop.xlane.xlu0 %114
    %v116 = vmul.f32 %v115, 0.03125
    %v117 = vmul.f32 %v116, %v61
    %v118 = vadd.f32 %v111, %v117
    %v119 = vmul.f32 %v97, %v66
    %v120 = vsel %vm68, %v119, 0.0
    %121 = vadd.xlane.f32.xlu0 %v120
    %v122 = vpop.xlane.xlu0 %121
    %v123 = vmul.f32 %v122, 0.03125
    %v124 = vmul.f32 %v123, %v66
    %v125 = vadd.f32 %v118, %v124
    %v126 = vadd.f32 %v125, 1e-12
    %v127 = vrsqrt.pop %v126
    %v128 = vmul.f32 %v96, %v127
    %v129 = vld [vmem:[%s2] sm:$0x1]
    %v131 = vlaneseq
    %v132 = vshrl.u32 %v131, 7
    %v133 = vsub.s32 0, %v132
    %v134 = vrot.slane %v129, %v133
    %v136 = vmul.f32 %v128, %v134
    %v137 = vld [vmem:[%s3] sm:$0x1]
    %v139 = vlaneseq
    %v140 = vshrl.u32 %v139, 7
    %v141 = vsub.s32 0, %v140
    %v142 = vrot.slane %v137, %v141
    %v144 = vadd.f32 %v136, %v142
    %145 = vst [vmem:[#allocation7] sm:$0xf] %v144
    // Predicated region
    $region26: #{tpu_custom_call.1} parent=1 // pred_check
      _
    $region27: #{tpu_custom_call.1} parent=1 // pred_check_branch
      %147 = sbr.rel (0) target = $region29
    $region28: #{tpu_custom_call.1} parent=1 // pred_region
      %s149 = ssub.s32 64, 64
      %150 = vsyncadd [#allocation4], %s149
      %s152 = sshll.u32 [#allocation7], 4
      %s153 = int_to_ptr.vmem [resolvable:$true] %s152
      %155 = dma.vmem_to_hbm [thread:$0]  %s153, 64, %s4, [#allocation4]
    $region29: #{tpu_custom_call.1} parent=1 // pred_fallthru
      _
    // Predicated region
    $region30: #{tpu_custom_call.1} parent=1 // pred_check
      _
    $region31: #{tpu_custom_call.1} parent=1 // pred_check_branch
      %157 = sbr.rel (0) target = $region33
    $region32: #{tpu_custom_call.1} parent=1 // pred_region
      %158 = dma.done [#allocation4], 64
    $region33: #{tpu_custom_call.1} parent=1 // pred_fallthru
      _
    %159 = vsyncpa [#allocation3], 1
    %160 = vsyncpa [#allocation6], 1
    %161 = vsyncpa [#allocation4], 1

</llo_original>
